<compile_context>
chip_gen: v5e
topology: v5e:2x2
jax: 0.10.0
libtpu: 0.0.40
codegen_flags: <defaults>
</compile_context>

<pallas_src>
import math

import jax
import jax.numpy as jnp
from jax.experimental import pallas as pl
from jax.experimental.pallas import tpu as pltpu


# Plain Python float: becomes an inline literal inside the kernel (a jnp
# scalar here would be captured as a constant and break kernel tracing).
_NEG_INF_FILL = -1000000000.0


# ----------------------------------------------------------------------------
# Tile / layout heuristics
# ----------------------------------------------------------------------------

def _head_block(num_heads, head_dim):
    """Heads per grid step: hb*D must be a multiple of 128 (lane-dense output
    slab + BlockSpec divisibility) or cover all heads."""
    for hb in range(1, num_heads + 1):
        if num_heads % hb == 0 and (hb * head_dim) % 128 == 0:
            return hb
    return num_heads


def _tile_options(seq_len, granule):
    """Divisors of S that are multiples of `granule`, plus S itself (a
    full-extent block is always a legal layout)."""
    opts = [d for d in range(granule, seq_len, granule) if seq_len % d == 0]
    opts.append(seq_len)
    return sorted(set(opts))


def _choose_tile(opts, target):
    fits = [o for o in opts if o <= target]
    return max(fits) if fits else min(opts)


def _lane_pad(n):
    return ((n + 127) // 128) * 128


def _sub_pad(n, g=8):
    return ((n + g - 1) // g) * g


def _vmem_estimate(hb, tq, tkv, D, in_bytes, out_bytes,
                   has_mask, single_kv, direct_out):
    """Rough live-VMEM estimate including 128-lane padding of small D."""
    Dp = _lane_pad(D)
    est = 2 * hb * _sub_pad(tq) * Dp * in_bytes            # q (double-buffered)
    est += 2 * 2 * hb * _sub_pad(tkv) * Dp * in_bytes      # k, v
    if has_mask:
        est += 2 * _sub_pad(tq, 32) * _lane_pad(tkv)       # int8 mask
    if direct_out:
        est += 2 * hb * _sub_pad(tq) * Dp * out_bytes      # output block
    else:
        est += 2 * _sub_pad(tq) * _lane_pad(hb * D) * out_bytes
    if not single_kv:
        est += hb * _sub_pad(tq) * (128 + 128 + Dp) * 4    # m/l/acc scratch (f32)
    est += 2 * _sub_pad(tq) * _lane_pad(tkv) * 4           # scores + exp temporaries
    return est


# ----------------------------------------------------------------------------
# Kernel
# ----------------------------------------------------------------------------

def _make_kernel(scale, mm_dtype, hb, D, has_mask, single_kv, direct_out,
                 exact_div):
    def _write_head(o_ref, h, res):
        # Sequential per-head write-out (no concatenate; bounds live ranges).
        if direct_out:
            o_ref[h] = res.astype(o_ref.dtype)
        else:
            o_ref[:, h * D:(h + 1) * D] = res.astype(o_ref.dtype)

    def kernel(*refs):
        if has_mask:
            q_ref, k_ref, v_ref, mask_ref, o_ref = refs[:5]
            scratch = refs[5:]
        else:
            q_ref, k_ref, v_ref, o_ref = refs[:4]
            mask_ref = None
            scratch = refs[4:]

        if has_mask:
            # int8 mask tile, loaded once per step and reused across heads.
            masked = mask_ref[...].astype(jnp.int32) == 0   # (tq, tkv) bool

        if single_kv:
            # Whole sequence in one KV block: exact single-pass softmax.
            for h in range(hb):                              # static unroll; hb small
                qh = (q_ref[h].astype(jnp.float32) * scale).astype(mm_dtype)
                s = jax.lax.dot_general(                     # q @ k^T, no k copy
                    qh, k_ref[h].astype(mm_dtype),
                    dimension_numbers=(((1,), (1,)), ((), ())),
                    preferred_element_type=jnp.float32)      # (tq, S) f32
                if has_mask:
                    s = jnp.where(masked, _NEG_INF_FILL, s)
                m = jnp.max(s, axis=-1, keepdims=True)
                e = jnp.exp(s - m)
                l = jnp.sum(e, axis=-1, keepdims=True)
                pv = jnp.dot(e.astype(mm_dtype), v_ref[h].astype(mm_dtype),
                             preferred_element_type=jnp.float32)
                if exact_div:
                    res = pv / l                              # exact f32 path
                else:
                    res = pv * pl.reciprocal(l, approx=True)  # EUP, bf16 path
                _write_head(o_ref, h, res)
            return

        # Flash path: online softmax across KV blocks (innermost grid axis).
        m_acc, l_acc, o_acc = scratch
        kv = pl.program_id(3)
        n_kv = pl.num_programs(3)

        @pl.when(kv == 0)
        def _():
            m_acc[...] = jnp.full(m_acc.shape, -jnp.inf, m_acc.dtype)
            l_acc[...] = jnp.zeros(l_acc.shape, l_acc.dtype)
            o_acc[...] = jnp.zeros(o_acc.shape, o_acc.dtype)

        for h in range(hb):                                   # static unroll
            qh = (q_ref[h].astype(jnp.float32) * scale).astype(mm_dtype)
            s = jax.lax.dot_general(
                qh, k_ref[h].astype(mm_dtype),
                dimension_numbers=(((1,), (1,)), ((), ())),
                preferred_element_type=jnp.float32)           # (tq, tkv) f32
            if has_mask:
                s = jnp.where(masked, _NEG_INF_FILL, s)
            m_prev = m_acc[h]
            m_new = jnp.maximum(m_prev, jnp.max(s, axis=-1, keepdims=True))
            alpha = jnp.exp(m_prev - m_new)
            p = jnp.exp(s - m_new)
            l_acc[h] = alpha * l_acc[h] + jnp.sum(p, axis=-1, keepdims=True)
            o_acc[h] = alpha * o_acc[h] + jnp.dot(
                p.astype(mm_dtype), v_ref[h].astype(mm_dtype),
                preferred_element_type=jnp.float32)
            m_acc[h] = m_new

        @pl.when(kv == n_kv - 1)
        def _():
            for h in range(hb):
                if exact_div:
                    res = o_acc[h] / l_acc[h]
                else:
                    res = o_acc[h] * pl.reciprocal(l_acc[h], approx=True)
                _write_head(o_ref, h, res)

    return kernel


# ----------------------------------------------------------------------------
# Wrapper
# ----------------------------------------------------------------------------

def scaled_dot_product_attention(q, k, v, att_mask=None, *, d_k=None,
                                 block_q=256, block_kv=1024,
                                 matmul_dtype=None,
                                 vmem_limit_bytes=48 * 1024 * 1024):
    """Pallas TPU implementation of the PyTorch ScaledDotProductAttention.

    q, k, v: (B, H, S, D).  att_mask: optional (B, S, S); entries equal to 0
    are masked out (broadcast over heads).  Returns (B, H, S, D) in q.dtype.
    Note: fully-masked rows yield uniform attention (consequence of the -1e9
    fill, matching the PyTorch reference).
    """
    B, H, S, D = q.shape
    if d_k is None:
        d_k = D
    scale = 1.0 / math.sqrt(d_k)

    # bf16 inputs -> bf16 MXU operands (f32 accumulation); f32 inputs -> f32.
    # TODO(synk): on v5e a bf16-operand path for f32 inputs would better match
    # the 4x128^2 MXU; kept opt-in via matmul_dtype.
    if matmul_dtype is None:
        matmul_dtype = q.dtype
    out_dtype = q.dtype
    exact_div = jnp.dtype(matmul_dtype) == jnp.dtype(jnp.float32)

    has_mask = att_mask is not None
    direct_out = (D % 128 == 0)          # per-head block already lane-dense

    hb = _head_block(H, D)
    in_bytes = jnp.dtype(q.dtype).itemsize
    out_bytes = jnp.dtype(out_dtype).itemsize

    # TQ: multiple of 32 (int8 mask sublane tile / bf16 packing / MXU M dim).
    # TKV: multiple of 128 (mask lane tile).  Full-S fallback for awkward S.
    tq_opts = _tile_options(S, 32)
    tkv_opts = _tile_options(S, 128)
    tq = _choose_tile(tq_opts, block_q)
    tkv = _choose_tile(tkv_opts, block_kv)

    # Shrink tiles until the (lane-padded) working set fits the VMEM budget.
    budget = int(0.75 * vmem_limit_bytes)
    while _vmem_estimate(hb, tq, tkv, D, in_bytes, out_bytes,
                         has_mask, tkv == S, direct_out) > budget:
        ikv, iq = tkv_opts.index(tkv), tq_opts.index(tq)
        if ikv > 0:
            tkv = tkv_opts[ikv - 1]
        elif iq > 0:
            tq = tq_opts[iq - 1]
        else:
            break

    n_hb, n_qb, n_kv = H // hb, S // tq, S // tkv
    single_kv = (n_kv == 1)

    # Grid ordering: when the softmax completes in one KV block, pick the
    # ordering whose redundant HBM stream is smaller (mask re-fetched per
    # head-block vs K/V re-fetched per q-block).
    if has_mask and single_kv:
        redundant_mask = (n_hb - 1) * S * S                       # int8 bytes / batch
        redundant_kv = (n_qb - 1) * H * S * D * 2 * in_bytes      # K+V bytes / batch
        head_axis_first = redundant_mask <= redundant_kv
    else:
        head_axis_first = True

    if head_axis_first:
        grid = (B, n_hb, n_qb, n_kv)
        hi = lambda g1, g2: (g1, g2)     # (head_block, q_block)
    else:
        grid = (B, n_qb, n_hb, n_kv)
        hi = lambda g1, g2: (g2, g1)

    def q_index(b, g1, g2, kv):
        h, i = hi(g1, g2)
        return (b, h, i, 0)

    def kv_index(b, g1, g2, kv):
        h, i = hi(g1, g2)
        return (b, h, kv, 0)

    def mask_index(b, g1, g2, kv):
        h, i = hi(g1, g2)
        return (b, i, kv)

    def out_index(b, g1, g2, kv):
        h, i = hi(g1, g2)
        return (b, h, i, 0) if direct_out else (b, i, h)

    q_spec = pl.BlockSpec((pl.Squeezed(), hb, tq, D), q_index)
    k_spec = pl.BlockSpec((pl.Squeezed(), hb, tkv, D), kv_index)
    v_spec = pl.BlockSpec((pl.Squeezed(), hb, tkv, D), kv_index)

    in_specs = [q_spec, k_spec, v_spec]
    inputs = [q, k, v]
    if has_mask:
        # int8 mask (4x less HBM/VMEM than int32); preserves the `== 0` test.
        in_specs.append(pl.BlockSpec((pl.Squeezed(), tq, tkv), mask_index))
        inputs.append((att_mask != 0).astype(jnp.int8))

    if direct_out:
        out_shape = jax.ShapeDtypeStruct((B, H, S, D), out_dtype)
        out_spec = pl.BlockSpec((pl.Squeezed(), hb, tq, D), out_index)
    else:
        # Lane-dense (B, S, H*D) slab (hb*D is a multiple of 128 or == H*D).
        out_shape = jax.ShapeDtypeStruct((B, S, H * D), out_dtype)
        out_spec = pl.BlockSpec((pl.Squeezed(), tq, hb * D), out_index)

    scratch_shapes = []
    if not single_kv:
        scratch_shapes = [pltpu.VMEM((hb, tq, 1), jnp.float32),   # running max
                          pltpu.VMEM((hb, tq, 1), jnp.float32),   # running denom
                          pltpu.VMEM((hb, tq, D), jnp.float32)]   # running PV acc

    kernel = _make_kernel(scale, matmul_dtype, hb, D, has_mask, single_kv,
                          direct_out, exact_div)

    out = pl.pallas_call(
        kernel,
        out_shape=out_shape,
        grid_spec=pltpu.PrefetchScalarGridSpec(
            num_scalar_prefetch=0,
            grid=grid,
            in_specs=in_specs,
            out_specs=out_spec,
            scratch_shapes=scratch_shapes,
        ),
        compiler_params=pltpu.CompilerParams(
            # Output blocks are revisited only across the KV axis -> it is
            # "arbitrary"; the rest are parallel (megacore / v7x sharding).
            dimension_semantics=("parallel", "parallel", "parallel",
                                 "arbitrary"),
            vmem_limit_bytes=vmem_limit_bytes,
        ),
    )(*inputs)

    if direct_out:
        return out
    # Layout plumbing back to the module's (B, H, S, D) convention.
    return jnp.transpose(out.reshape(B, S, H, D), (0, 2, 1, 3))


# ----------------------------------------------------------------------------
# Reference + tests
# ----------------------------------------------------------------------------

def _reference(q, k, v, att_mask, d_k):
    # Pure-JAX reference replicating the PyTorch forward (eval mode), f32.
    scores = jnp.einsum("bhqd,bhkd->bhqk", q.astype(jnp.float32),
                        k.astype(jnp.float32)) / math.sqrt(d_k)
    if att_mask is not None:
        scores = jnp.where(att_mask[:, None, :, :] == 0, _NEG_INF_FILL, scores)
    probs = jax.nn.softmax(scores, axis=-1)
    return jnp.einsum("bhqk,bhkd->bhqd", probs, v.astype(jnp.float32))


if __name__ == "__main__":
    root_key = jax.random.PRNGKey(0)

    def _case(B, H, S, D, masked, dtype, **kw):
        ks = jax.random.split(
            jax.random.fold_in(root_key, B * 100000 + H * 10000 + S * 10 + D), 4)
        qf = jax.random.normal(ks[0], (B, H, S, D), dtype=jnp.float32)
        kf = jax.random.normal(ks[1], (B, H, S, D), dtype=jnp.float32)
        vf = jax.random.normal(ks[2], (B, H, S, D), dtype=jnp.float32)
        mask = None
        if masked:
            mask = (jax.random.uniform(ks[3], (B, S, S)) > 0.2).astype(jnp.int32)
        qd, kd, vd = (x.astype(dtype) for x in (qf, kf, vf))

        out = jax.block_until_ready(
            scaled_dot_product_attention(qd, kd, vd, mask, d_k=D, **kw))
        ref = _reference(qf, kf, vf, mask, D)

        assert out.shape == (B, H, S, D), out.shape
        assert out.dtype == dtype, out.dtype
        tol = 1e-1 if dtype == jnp.bfloat16 else 2e-3
        err = float(jnp.max(jnp.abs(out.astype(jnp.float32) - ref)))
        assert err < tol, (B, H, S, D, masked, str(dtype), err)

    # 1) small masked f32 (single KV block, lane-dense output slab).
    _case(2, 4, 8, 32, True, jnp.float32)
    # 2) no mask -> specialized kernel variant (no mask traffic).
    _case(2, 4, 8, 32, False, jnp.float32)
    # 3) bf16 inputs -> bf16 MXU operands, f32 softmax stats, EUP reciprocal.
    _case(2, 4, 8, 32, True, jnp.bfloat16)
    # 4) multi-block flash path: KV grid axis + online-softmax accumulators.
    _case(2, 4, 256, 32, True, jnp.float32, block_q=128, block_kv=128)
    # 5) n_hb > 1 with mask -> mask-resident grid ordering (b, q_blk, h_blk).
    _case(1, 8, 64, 32, True, jnp.float32)
    # 6) D % 128 == 0 -> direct (B, H, S, D) output, no wrapper transpose.
    _case(1, 2, 16, 128, True, jnp.float32)

    print("KERNEL_OK")
</pallas_src>

<mosaic_0001>
module attributes {stable_mosaic.version = 11 : i64} {
  func.func @kernel(%arg0: i32, %arg1: i32, %arg2: i32, %arg3: i32, %arg4: memref<1x4x8x32xf32, #tpu.memory_space<vmem>>, %arg5: memref<1x4x8x32xf32, #tpu.memory_space<vmem>>, %arg6: memref<1x4x8x32xf32, #tpu.memory_space<vmem>>, %arg7: memref<1x8x8xi8, #tpu.memory_space<vmem>>, %arg8: memref<1x8x128xf32, #tpu.memory_space<vmem>>) attributes {dimension_semantics = [#tpu.dimension_semantics<parallel>, #tpu.dimension_semantics<parallel>, #tpu.dimension_semantics<parallel>, #tpu.dimension_semantics<arbitrary>], iteration_bounds = array<i64: 2, 1, 1, 1>, scalar_prefetch = 0 : i64, scratch_operands = 0 : i64, tpu.core_type = #tpu.core_type<tc>, window_params = [{transform_indices = @transform_0, window_bounds = array<i64: 1, 4, 8, 32>}, {transform_indices = @transform_1, window_bounds = array<i64: 1, 4, 8, 32>}, {transform_indices = @transform_2, window_bounds = array<i64: 1, 4, 8, 32>}, {transform_indices = @transform_3, window_bounds = array<i64: 1, 8, 8>}, {transform_indices = @transform_4, window_bounds = array<i64: 1, 8, 128>}]} {
    %c0 = arith.constant 0 : index
    %c0_0 = arith.constant 0 : index
    %c0_1 = arith.constant 0 : index
    %0 = vector.load %arg7[%c0, %c0_0, %c0_1] : memref<1x8x8xi8, #tpu.memory_space<vmem>>, vector<1x8x8xi8>
    %1 = vector.shape_cast %0 : vector<1x8x8xi8> to vector<8x8xi8>
    %2 = arith.extsi %1 : vector<8x8xi8> to vector<8x8xi32>
    %c0_i32 = arith.constant 0 : i32
    %3 = vector.broadcast %c0_i32 : i32 to vector<8x8xi32>
    %4 = arith.cmpi eq, %2, %3 : vector<8x8xi32>
    %c0_2 = arith.constant 0 : index
    %c0_3 = arith.constant 0 : index
    %c0_4 = arith.constant 0 : index
    %c0_5 = arith.constant 0 : index
    %5 = vector.load %arg4[%c0_2, %c0_3, %c0_4, %c0_5] : memref<1x4x8x32xf32, #tpu.memory_space<vmem>>, vector<1x1x8x32xf32>
    %6 = vector.shape_cast %5 : vector<1x1x8x32xf32> to vector<8x32xf32>
    %cst = arith.constant 0.176776692 : f32
    %7 = vector.broadcast %cst : f32 to vector<8x32xf32>
    %8 = arith.mulf %6, %7 : vector<8x32xf32>
    %c0_6 = arith.constant 0 : index
    %c0_7 = arith.constant 0 : index
    %c0_8 = arith.constant 0 : index
    %c0_9 = arith.constant 0 : index
    %9 = vector.load %arg5[%c0_6, %c0_7, %c0_8, %c0_9] : memref<1x4x8x32xf32, #tpu.memory_space<vmem>>, vector<1x1x8x32xf32>
    %10 = vector.shape_cast %9 : vector<1x1x8x32xf32> to vector<8x32xf32>
    %cst_10 = arith.constant dense<0.000000e+00> : vector<8x8xf32>
    %11 = tpu.matmul %8, %10, %cst_10 {dimension_numbers = #tpu.dot_dimension_numbers<[1], [1], [0], [0], [0, 0, 1, 0], [], []>} : vector<8x32xf32>, vector<8x32xf32>, vector<8x8xf32> -> vector<8x8xf32>
    %cst_11 = arith.constant -1.000000e+09 : f32
    %12 = vector.broadcast %cst_11 : f32 to vector<8x8xf32>
    %13 = arith.select %4, %12, %11 : vector<8x8xi1>, vector<8x8xf32>
    %cst_12 = arith.constant dense<0xFF800000> : vector<8xf32>
    %14 = vector.multi_reduction <maximumf>, %13, %cst_12 [1] : vector<8x8xf32> to vector<8xf32>
    %15 = vector.shape_cast %14 : vector<8xf32> to vector<8x1xf32>
    %16 = vector.broadcast %15 : vector<8x1xf32> to vector<8x8xf32>
    %17 = arith.subf %13, %16 : vector<8x8xf32>
    %18 = math.exp %17 : vector<8x8xf32>
    %cst_13 = arith.constant dense<0.000000e+00> : vector<8xf32>
    %19 = vector.multi_reduction <add>, %18, %cst_13 [1] : vector<8x8xf32> to vector<8xf32>
    %20 = vector.shape_cast %19 : vector<8xf32> to vector<8x1xf32>
    %c0_14 = arith.constant 0 : index
    %c0_15 = arith.constant 0 : index
    %c0_16 = arith.constant 0 : index
    %c0_17 = arith.constant 0 : index
    %21 = vector.load %arg6[%c0_14, %c0_15, %c0_16, %c0_17] : memref<1x4x8x32xf32, #tpu.memory_space<vmem>>, vector<1x1x8x32xf32>
    %22 = vector.shape_cast %21 : vector<1x1x8x32xf32> to vector<8x32xf32>
    %cst_18 = arith.constant dense<0.000000e+00> : vector<8x32xf32>
    %23 = tpu.matmul %18, %22, %cst_18 {dimension_numbers = #tpu.dot_dimension_numbers<[1], [0], [0], [1], [0, 0, 1, 1], [], []>} : vector<8x8xf32>, vector<8x32xf32>, vector<8x32xf32> -> vector<8x32xf32>
    %24 = vector.broadcast %20 : vector<8x1xf32> to vector<8x32xf32>
    %25 = arith.divf %23, %24 : vector<8x32xf32>
    %c0_19 = arith.constant 0 : index
    %c0_20 = arith.constant 0 : index
    %c0_21 = arith.constant 0 : index
    %26 = vector.load %arg8[%c0_19, %c0_20, %c0_21] : memref<1x8x128xf32, #tpu.memory_space<vmem>>, vector<1x8x32xf32>
    %27 = vector.shape_cast %26 : vector<1x8x32xf32> to vector<8x32xf32>
    %28 = vector.shape_cast %25 : vector<8x32xf32> to vector<1x8x32xf32>
    tpu.vector_store %arg8[%c0_19, %c0_20, %c0_21], %28 {strides = array<i32>} : memref<1x8x128xf32, #tpu.memory_space<vmem>>, vector<1x8x32xf32>,
    %c0_22 = arith.constant 0 : index
    %c1 = arith.constant 1 : index
    %c0_23 = arith.constant 0 : index
    %c0_24 = arith.constant 0 : index
    %29 = vector.load %arg4[%c0_22, %c1, %c0_23, %c0_24] : memref<1x4x8x32xf32, #tpu.memory_space<vmem>>, vector<1x1x8x32xf32>
    %30 = vector.shape_cast %29 : vector<1x1x8x32xf32> to vector<8x32xf32>
    %cst_25 = arith.constant 0.176776692 : f32
    %31 = vector.broadcast %cst_25 : f32 to vector<8x32xf32>
    %32 = arith.mulf %30, %31 : vector<8x32xf32>
    %c0_26 = arith.constant 0 : index
    %c1_27 = arith.constant 1 : index
    %c0_28 = arith.constant 0 : index
    %c0_29 = arith.constant 0 : index
    %33 = vector.load %arg5[%c0_26, %c1_27, %c0_28, %c0_29] : memref<1x4x8x32xf32, #tpu.memory_space<vmem>>, vector<1x1x8x32xf32>
    %34 = vector.shape_cast %33 : vector<1x1x8x32xf32> to vector<8x32xf32>
    %cst_30 = arith.constant dense<0.000000e+00> : vector<8x8xf32>
    %35 = tpu.matmul %32, %34, %cst_30 {dimension_numbers = #tpu.dot_dimension_numbers<[1], [1], [0], [0], [0, 0, 1, 0], [], []>} : vector<8x32xf32>, vector<8x32xf32>, vector<8x8xf32> -> vector<8x8xf32>
    %cst_31 = arith.constant -1.000000e+09 : f32
    %36 = vector.broadcast %cst_31 : f32 to vector<8x8xf32>
    %37 = arith.select %4, %36, %35 : vector<8x8xi1>, vector<8x8xf32>
    %cst_32 = arith.constant dense<0xFF800000> : vector<8xf32>
    %38 = vector.multi_reduction <maximumf>, %37, %cst_32 [1] : vector<8x8xf32> to vector<8xf32>
    %39 = vector.shape_cast %38 : vector<8xf32> to vector<8x1xf32>
    %40 = vector.broadcast %39 : vector<8x1xf32> to vector<8x8xf32>
    %41 = arith.subf %37, %40 : vector<8x8xf32>
    %42 = math.exp %41 : vector<8x8xf32>
    %cst_33 = arith.constant dense<0.000000e+00> : vector<8xf32>
    %43 = vector.multi_reduction <add>, %42, %cst_33 [1] : vector<8x8xf32> to vector<8xf32>
    %44 = vector.shape_cast %43 : vector<8xf32> to vector<8x1xf32>
    %c0_34 = arith.constant 0 : index
    %c1_35 = arith.constant 1 : index
    %c0_36 = arith.constant 0 : index
    %c0_37 = arith.constant 0 : index
    %45 = vector.load %arg6[%c0_34, %c1_35, %c0_36, %c0_37] : memref<1x4x8x32xf32, #tpu.memory_space<vmem>>, vector<1x1x8x32xf32>
    %46 = vector.shape_cast %45 : vector<1x1x8x32xf32> to vector<8x32xf32>
    %cst_38 = arith.constant dense<0.000000e+00> : vector<8x32xf32>
    %47 = tpu.matmul %42, %46, %cst_38 {dimension_numbers = #tpu.dot_dimension_numbers<[1], [0], [0], [1], [0, 0, 1, 1], [], []>} : vector<8x8xf32>, vector<8x32xf32>, vector<8x32xf32> -> vector<8x32xf32>
    %48 = vector.broadcast %44 : vector<8x1xf32> to vector<8x32xf32>
    %49 = arith.divf %47, %48 : vector<8x32xf32>
    %c0_39 = arith.constant 0 : index
    %c0_40 = arith.constant 0 : index
    %c32 = arith.constant 32 : index
    %50 = vector.load %arg8[%c0_39, %c0_40, %c32] : memref<1x8x128xf32, #tpu.memory_space<vmem>>, vector<1x8x32xf32>
    %51 = vector.shape_cast %50 : vector<1x8x32xf32> to vector<8x32xf32>
    %52 = vector.shape_cast %49 : vector<8x32xf32> to vector<1x8x32xf32>
    tpu.vector_store %arg8[%c0_39, %c0_40, %c32], %52 {strides = array<i32>} : memref<1x8x128xf32, #tpu.memory_space<vmem>>, vector<1x8x32xf32>,
    %c0_41 = arith.constant 0 : index
    %c2 = arith.constant 2 : index
    %c0_42 = arith.constant 0 : index
    %c0_43 = arith.constant 0 : index
    %53 = vector.load %arg4[%c0_41, %c2, %c0_42, %c0_43] : memref<1x4x8x32xf32, #tpu.memory_space<vmem>>, vector<1x1x8x32xf32>
    %54 = vector.shape_cast %53 : vector<1x1x8x32xf32> to vector<8x32xf32>
    %cst_44 = arith.constant 0.176776692 : f32
    %55 = vector.broadcast %cst_44 : f32 to vector<8x32xf32>
    %56 = arith.mulf %54, %55 : vector<8x32xf32>
    %c0_45 = arith.constant 0 : index
    %c2_46 = arith.constant 2 : index
    %c0_47 = arith.constant 0 : index
    %c0_48 = arith.constant 0 : index
    %57 = vector.load %arg5[%c0_45, %c2_46, %c0_47, %c0_48] : memref<1x4x8x32xf32, #tpu.memory_space<vmem>>, vector<1x1x8x32xf32>
    %58 = vector.shape_cast %57 : vector<1x1x8x32xf32> to vector<8x32xf32>
    %cst_49 = arith.constant dense<0.000000e+00> : vector<8x8xf32>
    %59 = tpu.matmul %56, %58, %cst_49 {dimension_numbers = #tpu.dot_dimension_numbers<[1], [1], [0], [0], [0, 0, 1, 0], [], []>} : vector<8x32xf32>, vector<8x32xf32>, vector<8x8xf32> -> vector<8x8xf32>
    %cst_50 = arith.constant -1.000000e+09 : f32
    %60 = vector.broadcast %cst_50 : f32 to vector<8x8xf32>
    %61 = arith.select %4, %60, %59 : vector<8x8xi1>, vector<8x8xf32>
    %cst_51 = arith.constant dense<0xFF800000> : vector<8xf32>
    %62 = vector.multi_reduction <maximumf>, %61, %cst_51 [1] : vector<8x8xf32> to vector<8xf32>
    %63 = vector.shape_cast %62 : vector<8xf32> to vector<8x1xf32>
    %64 = vector.broadcast %63 : vector<8x1xf32> to vector<8x8xf32>
    %65 = arith.subf %61, %64 : vector<8x8xf32>
    %66 = math.exp %65 : vector<8x8xf32>
    %cst_52 = arith.constant dense<0.000000e+00> : vector<8xf32>
    %67 = vector.multi_reduction <add>, %66, %cst_52 [1] : vector<8x8xf32> to vector<8xf32>
    %68 = vector.shape_cast %67 : vector<8xf32> to vector<8x1xf32>
    %c0_53 = arith.constant 0 : index
    %c2_54 = arith.constant 2 : index
    %c0_55 = arith.constant 0 : index
    %c0_56 = arith.constant 0 : index
    %69 = vector.load %arg6[%c0_53, %c2_54, %c0_55, %c0_56] : memref<1x4x8x32xf32, #tpu.memory_space<vmem>>, vector<1x1x8x32xf32>
    %70 = vector.shape_cast %69 : vector<1x1x8x32xf32> to vector<8x32xf32>
    %cst_57 = arith.constant dense<0.000000e+00> : vector<8x32xf32>
    %71 = tpu.matmul %66, %70, %cst_57 {dimension_numbers = #tpu.dot_dimension_numbers<[1], [0], [0], [1], [0, 0, 1, 1], [], []>} : vector<8x8xf32>, vector<8x32xf32>, vector<8x32xf32> -> vector<8x32xf32>
    %72 = vector.broadcast %68 : vector<8x1xf32> to vector<8x32xf32>
    %73 = arith.divf %71, %72 : vector<8x32xf32>
    %c0_58 = arith.constant 0 : index
    %c0_59 = arith.constant 0 : index
    %c64 = arith.constant 64 : index
    %74 = vector.load %arg8[%c0_58, %c0_59, %c64] : memref<1x8x128xf32, #tpu.memory_space<vmem>>, vector<1x8x32xf32>
    %75 = vector.shape_cast %74 : vector<1x8x32xf32> to vector<8x32xf32>
    %76 = vector.shape_cast %73 : vector<8x32xf32> to vector<1x8x32xf32>
    tpu.vector_store %arg8[%c0_58, %c0_59, %c64], %76 {strides = array<i32>} : memref<1x8x128xf32, #tpu.memory_space<vmem>>, vector<1x8x32xf32>,
    %c0_60 = arith.constant 0 : index
    %c3 = arith.constant 3 : index
    %c0_61 = arith.constant 0 : index
    %c0_62 = arith.constant 0 : index
    %77 = vector.load %arg4[%c0_60, %c3, %c0_61, %c0_62] : memref<1x4x8x32xf32, #tpu.memory_space<vmem>>, vector<1x1x8x32xf32>
    %78 = vector.shape_cast %77 : vector<1x1x8x32xf32> to vector<8x32xf32>
    %cst_63 = arith.constant 0.176776692 : f32
    %79 = vector.broadcast %cst_63 : f32 to vector<8x32xf32>
    %80 = arith.mulf %78, %79 : vector<8x32xf32>
    %c0_64 = arith.constant 0 : index
    %c3_65 = arith.constant 3 : index
    %c0_66 = arith.constant 0 : index
    %c0_67 = arith.constant 0 : index
    %81 = vector.load %arg5[%c0_64, %c3_65, %c0_66, %c0_67] : memref<1x4x8x32xf32, #tpu.memory_space<vmem>>, vector<1x1x8x32xf32>
    %82 = vector.shape_cast %81 : vector<1x1x8x32xf32> to vector<8x32xf32>
    %cst_68 = arith.constant dense<0.000000e+00> : vector<8x8xf32>
    %83 = tpu.matmul %80, %82, %cst_68 {dimension_numbers = #tpu.dot_dimension_numbers<[1], [1], [0], [0], [0, 0, 1, 0], [], []>} : vector<8x32xf32>, vector<8x32xf32>, vector<8x8xf32> -> vector<8x8xf32>
    %cst_69 = arith.constant -1.000000e+09 : f32
    %84 = vector.broadcast %cst_69 : f32 to vector<8x8xf32>
    %85 = arith.select %4, %84, %83 : vector<8x8xi1>, vector<8x8xf32>
    %cst_70 = arith.constant dense<0xFF800000> : vector<8xf32>
    %86 = vector.multi_reduction <maximumf>, %85, %cst_70 [1] : vector<8x8xf32> to vector<8xf32>
    %87 = vector.shape_cast %86 : vector<8xf32> to vector<8x1xf32>
    %88 = vector.broadcast %87 : vector<8x1xf32> to vector<8x8xf32>
    %89 = arith.subf %85, %88 : vector<8x8xf32>
    %90 = math.exp %89 : vector<8x8xf32>
    %cst_71 = arith.constant dense<0.000000e+00> : vector<8xf32>
    %91 = vector.multi_reduction <add>, %90, %cst_71 [1] : vector<8x8xf32> to vector<8xf32>
    %92 = vector.shape_cast %91 : vector<8xf32> to vector<8x1xf32>
    %c0_72 = arith.constant 0 : index
    %c3_73 = arith.constant 3 : index
    %c0_74 = arith.constant 0 : index
    %c0_75 = arith.constant 0 : index
    %93 = vector.load %arg6[%c0_72, %c3_73, %c0_74, %c0_75] : memref<1x4x8x32xf32, #tpu.memory_space<vmem>>, vector<1x1x8x32xf32>
    %94 = vector.shape_cast %93 : vector<1x1x8x32xf32> to vector<8x32xf32>
    %cst_76 = arith.constant dense<0.000000e+00> : vector<8x32xf32>
    %95 = tpu.matmul %90, %94, %cst_76 {dimension_numbers = #tpu.dot_dimension_numbers<[1], [0], [0], [1], [0, 0, 1, 1], [], []>} : vector<8x8xf32>, vector<8x32xf32>, vector<8x32xf32> -> vector<8x32xf32>
    %96 = vector.broadcast %92 : vector<8x1xf32> to vector<8x32xf32>
    %97 = arith.divf %95, %96 : vector<8x32xf32>
    %c0_77 = arith.constant 0 : index
    %c0_78 = arith.constant 0 : index
    %c96 = arith.constant 96 : index
    %98 = vector.load %arg8[%c0_77, %c0_78, %c96] : memref<1x8x128xf32, #tpu.memory_space<vmem>>, vector<1x8x32xf32>
    %99 = vector.shape_cast %98 : vector<1x8x32xf32> to vector<8x32xf32>
    %100 = vector.shape_cast %97 : vector<8x32xf32> to vector<1x8x32xf32>
    tpu.vector_store %arg8[%c0_77, %c0_78, %c96], %100 {strides = array<i32>} : memref<1x8x128xf32, #tpu.memory_space<vmem>>, vector<1x8x32xf32>,
    return
  }
  func.func @transform_0(%arg0: i32, %arg1: i32, %arg2: i32, %arg3: i32) -> (i32, i32, i32, i32) {
    %c0_i32 = arith.constant 0 : i32
    %c0_i32_0 = arith.constant 0 : i32
    return %arg0, %arg1, %arg2, %c0_i32 : i32, i32, i32, i32
  }
  func.func @transform_1(%arg0: i32, %arg1: i32, %arg2: i32, %arg3: i32) -> (i32, i32, i32, i32) {
    %c0_i32 = arith.constant 0 : i32
    %c0_i32_0 = arith.constant 0 : i32
    return %arg0, %arg1, %arg3, %c0_i32 : i32, i32, i32, i32
  }
  func.func @transform_2(%arg0: i32, %arg1: i32, %arg2: i32, %arg3: i32) -> (i32, i32, i32, i32) {
    %c0_i32 = arith.constant 0 : i32
    %c0_i32_0 = arith.constant 0 : i32
    return %arg0, %arg1, %arg3, %c0_i32 : i32, i32, i32, i32
  }
  func.func @transform_3(%arg0: i32, %arg1: i32, %arg2: i32, %arg3: i32) -> (i32, i32, i32) {
    %c0_i32 = arith.constant 0 : i32
    return %arg0, %arg2, %arg3 : i32, i32, i32
  }
  func.func @transform_4(%arg0: i32, %arg1: i32, %arg2: i32, %arg3: i32) -> (i32, i32, i32) {
    %c0_i32 = arith.constant 0 : i32
    return %arg0, %arg2, %arg1 : i32, i32, i32
  }
}

</mosaic_0001>

<llo_original>
// kernel: tpu_custom_call.1
$region0: #{tpu_custom_call.1}
  #allocation0 [shape = 'u32[]', space=smem, size = 0x4, offset = 0x4, fixed_abs, tag = 'smem constant byte address 0x4 - core index']
  #allocation1 [shape = 'u32[72,128]{1,0:T(1,128)}', space=vmem, size = 0x9000, scoped, tag = 'internal scratch']
  %s0 = inlined_call_operand.hbm [shape: f32[2,4,8,32], index: 0, kind: input, shape index: {}]
  %s1 = inlined_call_operand.hbm [shape: f32[2,4,8,32], index: 1, kind: input, shape index: {}]
  %s2 = inlined_call_operand.hbm [shape: f32[2,4,8,32], index: 2, kind: input, shape index: {}]
  %s3 = inlined_call_operand.hbm [shape: s8[2,8,8], index: 3, kind: input, shape index: {}]
  %s4 = inlined_call_operand.hbm [shape: f32[2,8,128], index: 4, kind: output, shape index: {}]
  %s5 = sld [smem:[#allocation0]]
  $region65: #{tpu_custom_call.1} parent=0
    _
  %s7 = ssub.s32 1, %s5
  %s8 = scalar_select 0, %s7, %s5
  $region1: #{tpu_custom_call.1} parent=0
    #allocation2 [shape = 'u8[32768]{0}', space=vmem, size = 0x8000, scoped, tag = 'input window, operand 0']
    #allocation3 [shape = 's32[2]{0}', space=sflag, size = 0x8, scoped, tag = 'scoped memory for tpu_custom_call.1']
    #allocation4 [shape = 's32[2]{0}', space=sflag, size = 0x8, scoped, tag = 'scoped memory for tpu_custom_call.1']
    #allocation5 [shape = 'u8[32768]{0}', space=vmem, size = 0x8000, scoped, tag = 'input window, operand 1']
    #allocation6 [shape = 's32[2]{0}', space=sflag, size = 0x8, scoped, tag = 'scoped memory for tpu_custom_call.1']
    #allocation7 [shape = 'u8[32768]{0}', space=vmem, size = 0x8000, scoped, tag = 'input window, operand 2']
    #allocation8 [shape = 'u8[2048]{0}', space=vmem, size = 0x800, scoped, tag = 'input window, operand 3']
    #allocation9 [shape = 's32[2]{0}', space=sflag, size = 0x8, scoped, tag = 'scoped memory for tpu_custom_call.1']
    #allocation10 [shape = 'u8[8192]{0}', space=vmem, size = 0x2000, scoped, tag = 'output window, operand 0']
    %9 = vsyncpa [#allocation3], 0
    %s10 = scalar_lea.sflag [#allocation3], 1
    %11 = vsyncpa %s10, 0
    %12 = vsyncpa [#allocation6], 0
    %s13 = scalar_lea.sflag [#allocation6], 1
    %14 = vsyncpa %s13, 0
    %15 = vsyncpa [#allocation9], 0
    %s16 = scalar_lea.sflag [#allocation9], 1
    %17 = vsyncpa %s16, 0
    %18 = vsyncpa [#allocation4], 0
    %s19 = scalar_lea.sflag [#allocation4], 1
    %20 = vsyncpa %s19, 0
    loop: start=0, step=1, limit=4
    $region2: #{tpu_custom_call.1} parent=1 // loop_pre_header
      _
    $region3: #{tpu_custom_call.1} parent=1 // loop_header
      %s22 = sphi 0, %s26
      %p23 = scmp.ge.s32.totalorder %s22, 4
      %s29 = sphi 0, %s55
      %s30 = sphi 0, %s51
      %s31 = sphi 0, %s47
      %s32 = sphi 0, %s43
      %s33 = sphi 0, %s29
      %s34 = sphi 0, %s30
      %s35 = sphi 0, %s31
      %s36 = sphi 0, %s32
      %s37 = sphi 0, %s33
      %s38 = sphi 0, %s34
      %s39 = sphi 0, %s35
      %s40 = sphi 0, %s36
      %s62 = sphi 0, %s64
      %s65 = sphi 0, %s62
      %s66 = sphi 0, %s65
      %s82 = sphi 0, %s66
      %s92 = sphi 0, %s94
      %s95 = sphi 0, %s92
      %s96 = sphi 0, %s95
      %s112 = sphi 0, %s96
      %s122 = sphi 0, %s124
      %s125 = sphi 0, %s122
      %s126 = sphi 0, %s125
      %s142 = sphi 0, %s126
      %s152 = sphi 0, %s154
      %s155 = sphi 0, %s152
      %s156 = sphi 0, %s155
      %s172 = sphi 0, %s156
      %s182 = sphi 0, %s184
      %s185 = sphi 0, %s182
      %s186 = sphi 0, %s185
      %s202 = sphi 0, %s186
    $region4: #{tpu_custom_call.1} parent=1 // loop_header_branch
      %25 = sbr.rel (%p23) target = $region8
    $region5: #{tpu_custom_call.1} parent=1 // loop_body
      %s27 = ssub.s32 %s22, 1
      %s28 = ssub.s32 %s22, 2
      %s41 = sadd.s32 1, %s32
      %p42 = scmp.ge.s32.totalorder %s41, 1
      %s43 = scalar_select %p42, 0, %s41
      %s44 = sadd.s32 1, %s31
      %s45 = scalar_select %p42, %s44, %s31
      %p46 = scmp.ge.s32.totalorder %s45, 1
      %s47 = scalar_select %p46, 0, %s45
      %s48 = sadd.s32 1, %s30
      %s49 = scalar_select %p46, %s48, %s30
      %p50 = scmp.ge.s32.totalorder %s49, 1
      %s51 = scalar_select %p50, 0, %s49
      %s52 = sadd.s32 1, %s29
      %s53 = scalar_select %p50, %s52, %s29
      %p54 = scmp.ge.s32.totalorder %s53, 2
      %s55 = scalar_select %p54, 0, %s53
      %s56 = ssub.s32 %s29, %s55
      %s57 = ssub.s32 %s30, %s51
      %s58 = sor.u32 %s56, %s57
      %s59 = ssub.s32 %s31, %s47
      %s60 = sor.u32 %s58, %s59
      %p61 = scmp.eq.s32.totalorder %s60, 0
      %s63 = sadd.s32 %s62, 1
      %s64 = scalar_select %p61, %s62, %s63
      %p67 = pneg %p61
      %p68 = scmp.eq.s32.totalorder %s22, 1
      %p69 = por %p67, %p68
      %p70 = scmp.ne.s32.totalorder %s62, %s65
      %p71 = scmp.eq.s32.totalorder %s22, 0
      %p72 = por %p70, %p71
      %p73 = scmp.ne.s32.totalorder %s62, %s65
      %p74 = scmp.eq.s32.totalorder %s27, 1
      %p75 = por %p73, %p74
      %p76 = scmp.ne.s32.totalorder %s65, %s66
      %p77 = scmp.eq.s32.totalorder %s27, 0
      %p78 = por %p76, %p77
      %p79 = scmp.ne.s32.totalorder %s65, %s66
      %p80 = scmp.eq.s32.totalorder %s28, 1
      %p81 = por %p79, %p80
      %p83 = scmp.ne.s32.totalorder %s66, %s82
      %p84 = scmp.eq.s32.totalorder %s28, 0
      %p85 = por %p83, %p84
      %s86 = ssub.s32 %s29, %s55
      %s87 = ssub.s32 %s30, %s51
      %s88 = sor.u32 %s86, %s87
      %s89 = ssub.s32 %s32, %s43
      %s90 = sor.u32 %s88, %s89
      %p91 = scmp.eq.s32.totalorder %s90, 0
      %s93 = sadd.s32 %s92, 1
      %s94 = scalar_select %p91, %s92, %s93
      %p97 = pneg %p91
      %p98 = scmp.eq.s32.totalorder %s22, 1
      %p99 = por %p97, %p98
      %p100 = scmp.ne.s32.totalorder %s92, %s95
      %p101 = scmp.eq.s32.totalorder %s22, 0
      %p102 = por %p100, %p101
      %p103 = scmp.ne.s32.totalorder %s92, %s95
      %p104 = scmp.eq.s32.totalorder %s27, 1
      %p105 = por %p103, %p104
      %p106 = scmp.ne.s32.totalorder %s95, %s96
      %p107 = scmp.eq.s32.totalorder %s27, 0
      %p108 = por %p106, %p107
      %p109 = scmp.ne.s32.totalorder %s95, %s96
      %p110 = scmp.eq.s32.totalorder %s28, 1
      %p111 = por %p109, %p110
      %p113 = scmp.ne.s32.totalorder %s96, %s112
      %p114 = scmp.eq.s32.totalorder %s28, 0
      %p115 = por %p113, %p114
      %s116 = ssub.s32 %s29, %s55
      %s117 = ssub.s32 %s30, %s51
      %s118 = sor.u32 %s116, %s117
      %s119 = ssub.s32 %s32, %s43
      %s120 = sor.u32 %s118, %s119
      %p121 = scmp.eq.s32.totalorder %s120, 0
      %s123 = sadd.s32 %s122, 1
      %s124 = scalar_select %p121, %s122, %s123
      %p127 = pneg %p121
      %p128 = scmp.eq.s32.totalorder %s22, 1
      %p129 = por %p127, %p128
      %p130 = scmp.ne.s32.totalorder %s122, %s125
      %p131 = scmp.eq.s32.totalorder %s22, 0
      %p132 = por %p130, %p131
      %p133 = scmp.ne.s32.totalorder %s122, %s125
      %p134 = scmp.eq.s32.totalorder %s27, 1
      %p135 = por %p133, %p134
      %p136 = scmp.ne.s32.totalorder %s125, %s126
      %p137 = scmp.eq.s32.totalorder %s27, 0
      %p138 = por %p136, %p137
      %p139 = scmp.ne.s32.totalorder %s125, %s126
      %p140 = scmp.eq.s32.totalorder %s28, 1
      %p141 = por %p139, %p140
      %p143 = scmp.ne.s32.totalorder %s126, %s142
      %p144 = scmp.eq.s32.totalorder %s28, 0
      %p145 = por %p143, %p144
      %s146 = ssub.s32 %s29, %s55
      %s147 = ssub.s32 %s31, %s47
      %s148 = sor.u32 %s146, %s147
      %s149 = ssub.s32 %s32, %s43
      %s150 = sor.u32 %s148, %s149
      %p151 = scmp.eq.s32.totalorder %s150, 0
      %s153 = sadd.s32 %s152, 1
      %s154 = scalar_select %p151, %s152, %s153
      %p157 = pneg %p151
      %p158 = scmp.eq.s32.totalorder %s22, 1
      %p159 = por %p157, %p158
      %p160 = scmp.ne.s32.totalorder %s152, %s155
      %p161 = scmp.eq.s32.totalorder %s22, 0
      %p162 = por %p160, %p161
      %p163 = scmp.ne.s32.totalorder %s152, %s155
      %p164 = scmp.eq.s32.totalorder %s27, 1
      %p165 = por %p163, %p164
      %p166 = scmp.ne.s32.totalorder %s155, %s156
      %p167 = scmp.eq.s32.totalorder %s27, 0
      %p168 = por %p166, %p167
      %p169 = scmp.ne.s32.totalorder %s155, %s156
      %p170 = scmp.eq.s32.totalorder %s28, 1
      %p171 = por %p169, %p170
      %p173 = scmp.ne.s32.totalorder %s156, %s172
      %p174 = scmp.eq.s32.totalorder %s28, 0
      %p175 = por %p173, %p174
      %s176 = ssub.s32 %s29, %s55
      %s177 = ssub.s32 %s31, %s47
      %s178 = sor.u32 %s176, %s177
      %s179 = ssub.s32 %s30, %s51
      %s180 = sor.u32 %s178, %s179
      %p181 = scmp.eq.s32.totalorder %s180, 0
      %s183 = sadd.s32 %s182, 1
      %s184 = scalar_select %p181, %s182, %s183
      %p187 = pneg %p181
      %p188 = scmp.eq.s32.totalorder %s22, 1
      %p189 = por %p187, %p188
      %p190 = scmp.ne.s32.totalorder %s182, %s185
      %p191 = scmp.eq.s32.totalorder %s22, 0
      %p192 = por %p190, %p191
      %p193 = scmp.ne.s32.totalorder %s182, %s185
      %p194 = scmp.eq.s32.totalorder %s27, 1
      %p195 = por %p193, %p194
      %p196 = scmp.ne.s32.totalorder %s185, %s186
      %p197 = scmp.eq.s32.totalorder %s27, 0
      %p198 = por %p196, %p197
      %p199 = scmp.ne.s32.totalorder %s185, %s186
      %p200 = scmp.eq.s32.totalorder %s28, 1
      %p201 = por %p199, %p200
      %p203 = scmp.ne.s32.totalorder %s186, %s202
      %p204 = scmp.eq.s32.totalorder %s28, 0
      %p205 = por %p203, %p204
      %p206 = scmp.le.s32.totalorder 1, %s22
      %p207 = scmp.lt.s32.totalorder %s22, 3
      %p208 = pnand %p206, %p207
      %p209 = pneg %p208
      // Predicated region
      $region9: #{tpu_custom_call.1} parent=5 // pred_check
        _
      $region10: #{tpu_custom_call.1} parent=5 // pred_check_branch
        %211 = sbr.rel (%p208) target = $region12
      $region11: #{tpu_custom_call.1} parent=5 // pred_region
        %s212 = ssub.s32 %s22, 1
      $region12: #{tpu_custom_call.1} parent=5 // pred_fallthru
        _
      %p213 = scmp.lt.s32.totalorder %s22, 2
      // Predicated region
      $region13: #{tpu_custom_call.1} parent=5 // pred_check
        %p214 = pneg %p213
      $region14: #{tpu_custom_call.1} parent=5 // pred_check_branch
        %216 = sbr.rel (%p214) target = $region16
      $region15: #{tpu_custom_call.1} parent=5 // pred_region
        // Predicated region
        $region17: #{tpu_custom_call.1} parent=15 // pred_check
          %p217 = pneg %p72
        $region18: #{tpu_custom_call.1} parent=15 // pred_check_branch
          %219 = sbr.rel (%p217) target = $region20
        $region19: #{tpu_custom_call.1} parent=15 // pred_region
          %s220 = sand.u32 %s62, 1
          %s221 = scalar_lea.sflag [#allocation3], %s220
          %s222 = sand.u32 %s62, 1
          %s223 = smul.addr %s222, 32
          %s224 = scalar_lea.vmem [#allocation2], %s223
          %s225 = smul.u32 4, %s30
          %227 = vsyncadd %s221, 0
          %s228 = sadd.s32 %s31, %s225
          %s229 = smul.addr %s29, 4
          %s230 = sadd.s32 %s228, %s229
          %s231 = smul.addr %s230, 8
          %s232 = scalar_lea.hbm %s0, %s231
          %s233 = sshll.u32 %s232, 4
          %s234 = int_to_ptr.hbm [resolvable:$true] %s233
          %s235 = sshll.u32 %s224, 4
          %s236 = int_to_ptr.vmem [resolvable:$true] %s235
          %241 = dma.hbm_to_vmem [thread:$0]  %s234, 512, %s236, %s221, 128, 128, 8
        $region20: #{tpu_custom_call.1} parent=15 // pred_fallthru
          _
        // Predicated region
        $region21: #{tpu_custom_call.1} parent=15 // pred_check
          %p242 = pneg %p102
        $region22: #{tpu_custom_call.1} parent=15 // pred_check_branch
          %244 = sbr.rel (%p242) target = $region24
        $region23: #{tpu_custom_call.1} parent=15 // pred_region
          %s245 = sand.u32 %s22, 1
          %s246 = scalar_lea.sflag [#allocation6], %s245
          %s247 = sand.u32 %s92, 1
          %s248 = smul.addr %s247, 32
          %s249 = scalar_lea.vmem [#allocation5], %s248
          %s250 = smul.u32 4, %s30
          %252 = vsyncadd %s246, 0
          %s253 = sadd.s32 %s32, %s250
          %s254 = smul.addr %s29, 4
          %s255 = sadd.s32 %s253, %s254
          %s256 = smul.addr %s255, 8
          %s257 = scalar_lea.hbm %s1, %s256
          %s258 = sshll.u32 %s257, 4
          %s259 = int_to_ptr.hbm [resolvable:$true] %s258
          %s260 = sshll.u32 %s249, 4
          %s261 = int_to_ptr.vmem [resolvable:$true] %s260
          %266 = dma.hbm_to_vmem [thread:$0]  %s259, 512, %s261, %s246, 128, 128, 8
        $region24: #{tpu_custom_call.1} parent=15 // pred_fallthru
          _
        // Predicated region
        $region25: #{tpu_custom_call.1} parent=15 // pred_check
          %p267 = pneg %p132
        $region26: #{tpu_custom_call.1} parent=15 // pred_check_branch
          %269 = sbr.rel (%p267) target = $region28
        $region27: #{tpu_custom_call.1} parent=15 // pred_region
          %s270 = sand.u32 %s22, 1
          %s271 = scalar_lea.sflag [#allocation6], %s270
          %s272 = sand.u32 %s122, 1
          %s273 = smul.addr %s272, 32
          %s274 = scalar_lea.vmem [#allocation7], %s273
          %s275 = smul.u32 4, %s30
          %277 = vsyncadd %s271, 0
          %s278 = sadd.s32 %s32, %s275
          %s279 = smul.addr %s29, 4
          %s280 = sadd.s32 %s278, %s279
          %s281 = smul.addr %s280, 8
          %s282 = scalar_lea.hbm %s2, %s281
          %s283 = sshll.u32 %s282, 4
          %s284 = int_to_ptr.hbm [resolvable:$true] %s283
          %s285 = sshll.u32 %s274, 4
          %s286 = int_to_ptr.vmem [resolvable:$true] %s285
          %291 = dma.hbm_to_vmem [thread:$0]  %s284, 512, %s286, %s271, 128, 128, 8
        $region28: #{tpu_custom_call.1} parent=15 // pred_fallthru
          _
        // Predicated region
        $region29: #{tpu_custom_call.1} parent=15 // pred_check
          %p292 = pneg %p162
        $region30: #{tpu_custom_call.1} parent=15 // pred_check_branch
          %294 = sbr.rel (%p292) target = $region32
        $region31: #{tpu_custom_call.1} parent=15 // pred_region
          %s295 = sand.u32 %s152, 1
          %s296 = scalar_lea.sflag [#allocation9], %s295
          %s297 = sand.u32 %s152, 1
          %s298 = smul.addr %s297, 2
          %s299 = scalar_lea.vmem [#allocation8], %s298
          %301 = vsyncadd %s296, 0
          %s302 = sadd.s32 %s32, %s31
          %s303 = sadd.s32 %s302, %s29
          %s304 = smul.addr %s303, 2
          %s305 = scalar_lea.hbm %s3, %s304
          %s307 = sshll.u32 %s305, 4
          %s308 = int_to_ptr.hbm [resolvable:$true] %s307
          %s309 = sshll.u32 %s299, 4
          %s310 = int_to_ptr.vmem [resolvable:$true] %s309
          %312 = dma.hbm_to_vmem [thread:$0]  %s308, 32, %s310, %s296
        $region32: #{tpu_custom_call.1} parent=15 // pred_fallthru
          _
      $region16: #{tpu_custom_call.1} parent=5 // pred_fallthru
        _
      %p313 = scmp.le.s32.totalorder 1, %s22
      %p314 = scmp.lt.s32.totalorder %s22, 3
      %p315 = pnand %p313, %p314
      %p316 = pneg %p315
      // Predicated region
      $region33: #{tpu_custom_call.1} parent=5 // pred_check
        _
      $region34: #{tpu_custom_call.1} parent=5 // pred_check_branch
        %318 = sbr.rel (%p315) target = $region36
      $region35: #{tpu_custom_call.1} parent=5 // pred_region
        %s319 = ssub.s32 %s22, 1
        %s320 = sand.u32 %s65, 1
        %s321 = scalar_lea.sflag [#allocation3], %s320
        %s322 = sand.u32 %s65, 1
        %s323 = smul.addr %s322, 32
        %s324 = scalar_lea.vmem [#allocation2], %s323
        // Predicated region
        $region37: #{tpu_custom_call.1} parent=35 // pred_check
          %p325 = pneg %p78
        $region38: #{tpu_custom_call.1} parent=35 // pred_check_branch
          %327 = sbr.rel (%p325) target = $region40
        $region39: #{tpu_custom_call.1} parent=35 // pred_region
          %329 = dma.done %s321, 512
        $region40: #{tpu_custom_call.1} parent=35 // pred_fallthru
          _
        %s330 = sand.u32 %s27, 1
        %s331 = scalar_lea.sflag [#allocation6], %s330
        %s332 = sand.u32 %s95, 1
        %s333 = smul.addr %s332, 32
        %s334 = scalar_lea.vmem [#allocation5], %s333
        // Predicated region
        $region41: #{tpu_custom_call.1} parent=35 // pred_check
          %p335 = pneg %p108
        $region42: #{tpu_custom_call.1} parent=35 // pred_check_branch
          %337 = sbr.rel (%p335) target = $region44
        $region43: #{tpu_custom_call.1} parent=35 // pred_region
          %339 = dma.done %s331, 512
        $region44: #{tpu_custom_call.1} parent=35 // pred_fallthru
          _
        %s340 = sand.u32 %s27, 1
        %s341 = scalar_lea.sflag [#allocation6], %s340
        %s342 = sand.u32 %s125, 1
        %s343 = smul.addr %s342, 32
        %s344 = scalar_lea.vmem [#allocation7], %s343
        // Predicated region
        $region45: #{tpu_custom_call.1} parent=35 // pred_check
          %p345 = pneg %p138
        $region46: #{tpu_custom_call.1} parent=35 // pred_check_branch
          %347 = sbr.rel (%p345) target = $region48
        $region47: #{tpu_custom_call.1} parent=35 // pred_region
          %349 = dma.done %s341, 512
        $region48: #{tpu_custom_call.1} parent=35 // pred_fallthru
          _
        %s350 = sand.u32 %s155, 1
        %s351 = scalar_lea.sflag [#allocation9], %s350
        %s352 = sand.u32 %s155, 1
        %s353 = smul.addr %s352, 2
        %s354 = scalar_lea.vmem [#allocation8], %s353
        // Predicated region
        $region49: #{tpu_custom_call.1} parent=35 // pred_check
          %p355 = pneg %p168
        $region50: #{tpu_custom_call.1} parent=35 // pred_check_branch
          %357 = sbr.rel (%p355) target = $region52
        $region51: #{tpu_custom_call.1} parent=35 // pred_region
          %359 = dma.done %s351, 32
        $region52: #{tpu_custom_call.1} parent=35 // pred_fallthru
          _
        %s360 = sand.u32 %s65, 1
        %s361 = scalar_lea.sflag [#allocation3], %s360
        %s362 = sand.u32 %s65, 1
        %s363 = smul.addr %s362, 32
        %s364 = scalar_lea.vmem [#allocation2], %s363
        %p365 = pneg %p78
        %p366 = pneg %p75
        %s367 = sand.u32 %s27, 1
        %s368 = scalar_lea.sflag [#allocation6], %s367
        %s369 = sand.u32 %s95, 1
        %s370 = smul.addr %s369, 32
        %s371 = scalar_lea.vmem [#allocation5], %s370
        %p372 = pneg %p108
        %p373 = pneg %p105
        %s374 = sand.u32 %s27, 1
        %s375 = scalar_lea.sflag [#allocation6], %s374
        %s376 = sand.u32 %s125, 1
        %s377 = smul.addr %s376, 32
        %s378 = scalar_lea.vmem [#allocation7], %s377
        %p379 = pneg %p138
        %p380 = pneg %p135
        %s381 = sand.u32 %s155, 1
        %s382 = scalar_lea.sflag [#allocation9], %s381
        %s383 = sand.u32 %s155, 1
        %s384 = smul.addr %s383, 2
        %s385 = scalar_lea.vmem [#allocation8], %s384
        %p386 = pneg %p168
        %p387 = pneg %p165
        %p388 = pneg %p198
        %p389 = pneg %p195
        %s390 = sand.u32 %s185, 1
        %s391 = scalar_lea.sflag [#allocation4], %s390
        %s392 = sand.u32 %s185, 1
        %s393 = smul.addr %s392, 8
        %s394 = scalar_lea.vmem [#allocation10], %s393
        %s395 = smul.u32 4, %s34
        %s396 = smul.u32 4, %s34
        %s397 = smul.u32 4, %s34
        %v398 = vld [vmem:[%s354] sm:$0x3]
        %v399 = vunpack.c.0.s8 %v398
        %vm400 = vcmp.eq.s32.totalorder %v399, 0
        %v401 = vld [vmem:[%s324] sm:$0xff]
        %v402 = vmul.f32 %v401, 0.17677669
        %v403 = vld [vmem:[%s334] sm:$0xff]
        %vm404 = vcmask 261120
        %v406 = vsel %vm404, %v402, 0
        %v409 = vsel %vm404, %v403, 0
        %411 = vmatpush.xpose.msra.mxu0 0.0
        %412 = vmatpush.xpose.msra.mxu0 0.0
        %413 = vmatpush.xpose.msra.mxu0 0.0
        %414 = vmatpush.xpose.msra.mxu0 0.0
        %415 = vmatpush.xpose.msra.mxu0 0.0
        %416 = vmatpush.xpose.msra.mxu0 0.0
        %417 = vmatpush.xpose.msra.mxu0 0.0
        %418 = vmatpush.xpose.msra.mxu0 0.0
        %419 = vmatpush.xpose.msra.mxu0 0.0
        %420 = vmatpush.xpose.msra.mxu0 0.0
        %421 = vmatpush.xpose.msra.mxu0 0.0
        %422 = vmatpush.xpose.msra.mxu0 0.0
        %423 = vmatpush.xpose.msra.mxu0 0.0
        %424 = vmatpush.xpose.msra.mxu0 0.0
        %425 = vmatpush.xpose.msra.mxu0 0.0
        %426 = vmatpush.xpose.msra.mxu0 %v409
        %427 = vmatmul.f32.gmra.mxu0 %v406
        %v428 = vpop.f32.mrf.mxu0
        %v429 = vadd.f32 0.0, %v428
        %430 = vdwg.mxu0
        %v431 = vsel %vm400, -1e+09, %v429
        %vm432 = vcmask 64512
        %v433 = vsel %vm432, %v431, -inf
        %434 = vmax.xlane.f32.xlu0 %v433
        %v435 = vpop.xlane.xlu0 %434
        %v436 = vsub.f32 %v431, %v435
        %v437 = vmul.f32 %v436, 1.442695
        %v438 = vpow.pop %v437
        %v439 = vsel %vm432, %v438, 0.0
        %440 = vadd.xlane.f32.xlu0 %v439
        %v441 = vpop.xlane.xlu0 %440
        %v442 = vld [vmem:[%s344] sm:$0xff]
        %v444 = vsel %vm432, %v438, 0
        %446 = vmatpush.msra.mxu0 0.0
        %447 = vmatpush.msra.mxu0 0.0
        %448 = vmatpush.msra.mxu0 0.0
        %449 = vmatpush.msra.mxu0 0.0
        %450 = vmatpush.msra.mxu0 0.0
        %451 = vmatpush.msra.mxu0 0.0
        %452 = vmatpush.msra.mxu0 0.0
        %453 = vmatpush.msra.mxu0 0.0
        %454 = vmatpush.msra.mxu0 0.0
        %455 = vmatpush.msra.mxu0 0.0
        %456 = vmatpush.msra.mxu0 0.0
        %457 = vmatpush.msra.mxu0 0.0
        %458 = vmatpush.msra.mxu0 0.0
        %459 = vmatpush.msra.mxu0 0.0
        %460 = vmatpush.msra.mxu0 0.0
        %461 = vmatpush.msra.mxu0 %v442
        %462 = vmatmul.f32.gmra.mxu0 %v444
        %v463 = vpop.f32.mrf.mxu0
        %v464 = vadd.f32 0.0, %v463
        %465 = vdwg.mxu0
        %v466 = vrcp.pop %v441
        %v467 = vmul.f32 %v441, %v466
        %v468 = vsub.f32 1.0, %v467
        %v469 = vmul.f32 %v466, %v468
        %v470 = vadd.f32 %v466, %v469
        %vm471 = vweird.f32 %v441
        %vm472 = vweird.f32 %v466
        %vm473 = vmor %vm471, %vm472
        %v474 = vsel %vm473, %v466, %v470
        %v475 = vand.u32 2147483647, %v441
        %vm476 = vcmp.eq.f32.partialorder %v475, 8.507059e+37
        %v477 = vand.u32 %v441, 2147483648
        %v478 = vor.u32 1.1754944e-38, %v477
        %v479 = vsel %vm476, %v478, %v474
        %v480 = vmul.f32 %v464, %v479
        %481 = vst.msk [vmem:[%s394] sm:$0xff] %vm404, %v480
        %s482 = scalar_lea.vmem %s324, 8 [#allocation2]
        %v483 = vld [vmem:[%s482] sm:$0xff]
        %v484 = vmul.f32 %v483, 0.17677669
        %s485 = scalar_lea.vmem %s334, 8 [#allocation5]
        %v486 = vld [vmem:[%s485] sm:$0xff]
        %v488 = vsel %vm404, %v484, 0
        %v491 = vsel %vm404, %v486, 0
        %493 = vmatpush.xpose.msra.mxu0 0.0
        %494 = vmatpush.xpose.msra.mxu0 0.0
        %495 = vmatpush.xpose.msra.mxu0 0.0
        %496 = vmatpush.xpose.msra.mxu0 0.0
        %497 = vmatpush.xpose.msra.mxu0 0.0
        %498 = vmatpush.xpose.msra.mxu0 0.0
        %499 = vmatpush.xpose.msra.mxu0 0.0
        %500 = vmatpush.xpose.msra.mxu0 0.0
        %501 = vmatpush.xpose.msra.mxu0 0.0
        %502 = vmatpush.xpose.msra.mxu0 0.0
        %503 = vmatpush.xpose.msra.mxu0 0.0
        %504 = vmatpush.xpose.msra.mxu0 0.0
        %505 = vmatpush.xpose.msra.mxu0 0.0
        %506 = vmatpush.xpose.msra.mxu0 0.0
        %507 = vmatpush.xpose.msra.mxu0 0.0
        %508 = vmatpush.xpose.msra.mxu0 %v491
        %509 = vmatmul.f32.gmra.mxu0 %v488
        %v510 = vpop.f32.mrf.mxu0
        %v511 = vadd.f32 0.0, %v510
        %512 = vdwg.mxu0
        %v513 = vsel %vm400, -1e+09, %v511
        %v514 = vsel %vm432, %v513, -inf
        %515 = vmax.xlane.f32.xlu0 %v514
        %v516 = vpop.xlane.xlu0 %515
        %v517 = vsub.f32 %v513, %v516
        %v518 = vmul.f32 %v517, 1.442695
        %v519 = vpow.pop %v518
        %v520 = vsel %vm432, %v519, 0.0
        %521 = vadd.xlane.f32.xlu0 %v520
        %v522 = vpop.xlane.xlu0 %521
        %s523 = scalar_lea.vmem %s344, 8 [#allocation7]
        %v524 = vld [vmem:[%s523] sm:$0xff]
        %v526 = vsel %vm432, %v519, 0
        %528 = vmatpush.msra.mxu0 0.0
        %529 = vmatpush.msra.mxu0 0.0
        %530 = vmatpush.msra.mxu0 0.0
        %531 = vmatpush.msra.mxu0 0.0
        %532 = vmatpush.msra.mxu0 0.0
        %533 = vmatpush.msra.mxu0 0.0
        %534 = vmatpush.msra.mxu0 0.0
        %535 = vmatpush.msra.mxu0 0.0
        %536 = vmatpush.msra.mxu0 0.0
        %537 = vmatpush.msra.mxu0 0.0
        %538 = vmatpush.msra.mxu0 0.0
        %539 = vmatpush.msra.mxu0 0.0
        %540 = vmatpush.msra.mxu0 0.0
        %541 = vmatpush.msra.mxu0 0.0
        %542 = vmatpush.msra.mxu0 0.0
        %543 = vmatpush.msra.mxu0 %v524
        %544 = vmatmul.f32.gmra.mxu0 %v526
        %v545 = vpop.f32.mrf.mxu0
        %v546 = vadd.f32 0.0, %v545
        %547 = vdwg.mxu0
        %v548 = vrcp.pop %v522
        %v549 = vmul.f32 %v522, %v548
        %v550 = vsub.f32 1.0, %v549
        %v551 = vmul.f32 %v548, %v550
        %v552 = vadd.f32 %v548, %v551
        %vm553 = vweird.f32 %v522
        %vm554 = vweird.f32 %v548
        %vm555 = vmor %vm553, %vm554
        %v556 = vsel %vm555, %v548, %v552
        %v557 = vand.u32 2147483647, %v522
        %vm558 = vcmp.eq.f32.partialorder %v557, 8.507059e+37
        %v559 = vand.u32 %v522, 2147483648
        %v560 = vor.u32 1.1754944e-38, %v559
        %v561 = vsel %vm558, %v560, %v556
        %v562 = vmul.f32 %v546, %v561
        %564 = vrot.lane.b32.xlu0 %v562, 32
        %v565 = vpop.permute.xlu0 %564
        %vm567 = vcmask 523520
        %568 = vst.msk [vmem:[%s394] sm:$0xff] %vm567, %v565
        %s569 = scalar_lea.vmem %s324, 16 [#allocation2]
        %v570 = vld [vmem:[%s569] sm:$0xff]
        %v571 = vmul.f32 %v570, 0.17677669
        %s572 = scalar_lea.vmem %s334, 16 [#allocation5]
        %v573 = vld [vmem:[%s572] sm:$0xff]
        %v575 = vsel %vm404, %v571, 0
        %v578 = vsel %vm404, %v573, 0
        %580 = vmatpush.xpose.msra.mxu0 0.0
        %581 = vmatpush.xpose.msra.mxu0 0.0
        %582 = vmatpush.xpose.msra.mxu0 0.0
        %583 = vmatpush.xpose.msra.mxu0 0.0
        %584 = vmatpush.xpose.msra.mxu0 0.0
        %585 = vmatpush.xpose.msra.mxu0 0.0
        %586 = vmatpush.xpose.msra.mxu0 0.0
        %587 = vmatpush.xpose.msra.mxu0 0.0
        %588 = vmatpush.xpose.msra.mxu0 0.0
        %589 = vmatpush.xpose.msra.mxu0 0.0
        %590 = vmatpush.xpose.msra.mxu0 0.0
        %591 = vmatpush.xpose.msra.mxu0 0.0
        %592 = vmatpush.xpose.msra.mxu0 0.0
        %593 = vmatpush.xpose.msra.mxu0 0.0
        %594 = vmatpush.xpose.msra.mxu0 0.0
        %595 = vmatpush.xpose.msra.mxu0 %v578
        %596 = vmatmul.f32.gmra.mxu0 %v575
        %v597 = vpop.f32.mrf.mxu0
        %v598 = vadd.f32 0.0, %v597
        %599 = vdwg.mxu0
        %v600 = vsel %vm400, -1e+09, %v598
        %v601 = vsel %vm432, %v600, -inf
        %602 = vmax.xlane.f32.xlu0 %v601
        %v603 = vpop.xlane.xlu0 %602
        %v604 = vsub.f32 %v600, %v603
        %v605 = vmul.f32 %v604, 1.442695
        %v606 = vpow.pop %v605
        %v607 = vsel %vm432, %v606, 0.0
        %608 = vadd.xlane.f32.xlu0 %v607
        %v609 = vpop.xlane.xlu0 %608
        %s610 = scalar_lea.vmem %s344, 16 [#allocation7]
        %v611 = vld [vmem:[%s610] sm:$0xff]
        %v613 = vsel %vm432, %v606, 0
        %615 = vmatpush.msra.mxu0 0.0
        %616 = vmatpush.msra.mxu0 0.0
        %617 = vmatpush.msra.mxu0 0.0
        %618 = vmatpush.msra.mxu0 0.0
        %619 = vmatpush.msra.mxu0 0.0
        %620 = vmatpush.msra.mxu0 0.0
        %621 = vmatpush.msra.mxu0 0.0
        %622 = vmatpush.msra.mxu0 0.0
        %623 = vmatpush.msra.mxu0 0.0
        %624 = vmatpush.msra.mxu0 0.0
        %625 = vmatpush.msra.mxu0 0.0
        %626 = vmatpush.msra.mxu0 0.0
        %627 = vmatpush.msra.mxu0 0.0
        %628 = vmatpush.msra.mxu0 0.0
        %629 = vmatpush.msra.mxu0 0.0
        %630 = vmatpush.msra.mxu0 %v611
        %631 = vmatmul.f32.gmra.mxu0 %v613
        %v632 = vpop.f32.mrf.mxu0
        %v633 = vadd.f32 0.0, %v632
        %634 = vdwg.mxu0
        %v635 = vrcp.pop %v609
        %v636 = vmul.f32 %v609, %v635
        %v637 = vsub.f32 1.0, %v636
        %v638 = vmul.f32 %v635, %v637
        %v639 = vadd.f32 %v635, %v638
        %vm640 = vweird.f32 %v609
        %vm641 = vweird.f32 %v635
        %vm642 = vmor %vm640, %vm641
        %v643 = vsel %vm642, %v635, %v639
        %v644 = vand.u32 2147483647, %v609
        %vm645 = vcmp.eq.f32.partialorder %v644, 8.507059e+37
        %v646 = vand.u32 %v609, 2147483648
        %v647 = vor.u32 1.1754944e-38, %v646
        %v648 = vsel %vm645, %v647, %v643
        %v649 = vmul.f32 %v633, %v648
        %651 = vrot.lane.b32.xlu0 %v649, 64
        %v652 = vpop.permute.xlu0 %651
        %vm654 = vcmask 785920
        %655 = vst.msk [vmem:[%s394] sm:$0xff] %vm654, %v652
        %s656 = scalar_lea.vmem %s324, 24 [#allocation2]
        %v657 = vld [vmem:[%s656] sm:$0xff]
        %v658 = vmul.f32 %v657, 0.17677669
        %s659 = scalar_lea.vmem %s334, 24 [#allocation5]
        %v660 = vld [vmem:[%s659] sm:$0xff]
        %v662 = vsel %vm404, %v658, 0
        %v665 = vsel %vm404, %v660, 0
        %667 = vmatpush.xpose.msra.mxu0 0.0
        %668 = vmatpush.xpose.msra.mxu0 0.0
        %669 = vmatpush.xpose.msra.mxu0 0.0
        %670 = vmatpush.xpose.msra.mxu0 0.0
        %671 = vmatpush.xpose.msra.mxu0 0.0
        %672 = vmatpush.xpose.msra.mxu0 0.0
        %673 = vmatpush.xpose.msra.mxu0 0.0
        %674 = vmatpush.xpose.msra.mxu0 0.0
        %675 = vmatpush.xpose.msra.mxu0 0.0
        %676 = vmatpush.xpose.msra.mxu0 0.0
        %677 = vmatpush.xpose.msra.mxu0 0.0
        %678 = vmatpush.xpose.msra.mxu0 0.0
        %679 = vmatpush.xpose.msra.mxu0 0.0
        %680 = vmatpush.xpose.msra.mxu0 0.0
        %681 = vmatpush.xpose.msra.mxu0 0.0
        %682 = vmatpush.xpose.msra.mxu0 %v665
        %683 = vmatmul.f32.gmra.mxu0 %v662
        %v684 = vpop.f32.mrf.mxu0
        %v685 = vadd.f32 0.0, %v684
        %686 = vdwg.mxu0
        %v687 = vsel %vm400, -1e+09, %v685
        %v688 = vsel %vm432, %v687, -inf
        %689 = vmax.xlane.f32.xlu0 %v688
        %v690 = vpop.xlane.xlu0 %689
        %v691 = vsub.f32 %v687, %v690
        %v692 = vmul.f32 %v691, 1.442695
        %v693 = vpow.pop %v692
        %v694 = vsel %vm432, %v693, 0.0
        %695 = vadd.xlane.f32.xlu0 %v694
        %v696 = vpop.xlane.xlu0 %695
        %s697 = scalar_lea.vmem %s344, 24 [#allocation7]
        %v698 = vld [vmem:[%s697] sm:$0xff]
        %v700 = vsel %vm432, %v693, 0
        %702 = vmatpush.msra.mxu0 0.0
        %703 = vmatpush.msra.mxu0 0.0
        %704 = vmatpush.msra.mxu0 0.0
        %705 = vmatpush.msra.mxu0 0.0
        %706 = vmatpush.msra.mxu0 0.0
        %707 = vmatpush.msra.mxu0 0.0
        %708 = vmatpush.msra.mxu0 0.0
        %709 = vmatpush.msra.mxu0 0.0
        %710 = vmatpush.msra.mxu0 0.0
        %711 = vmatpush.msra.mxu0 0.0
        %712 = vmatpush.msra.mxu0 0.0
        %713 = vmatpush.msra.mxu0 0.0
        %714 = vmatpush.msra.mxu0 0.0
        %715 = vmatpush.msra.mxu0 0.0
        %716 = vmatpush.msra.mxu0 0.0
        %717 = vmatpush.msra.mxu0 %v698
        %718 = vmatmul.f32.gmra.mxu0 %v700
        %v719 = vpop.f32.mrf.mxu0
        %v720 = vadd.f32 0.0, %v719
        %721 = vdwg.mxu0
        %v722 = vrcp.pop %v696
        %v723 = vmul.f32 %v696, %v722
        %v724 = vsub.f32 1.0, %v723
        %v725 = vmul.f32 %v722, %v724
        %v726 = vadd.f32 %v722, %v725
        %vm727 = vweird.f32 %v696
        %vm728 = vweird.f32 %v722
        %vm729 = vmor %vm727, %vm728
        %v730 = vsel %vm729, %v722, %v726
        %v731 = vand.u32 2147483647, %v696
        %vm732 = vcmp.eq.f32.partialorder %v731, 8.507059e+37
        %v733 = vand.u32 %v696, 2147483648
        %v734 = vor.u32 1.1754944e-38, %v733
        %v735 = vsel %vm732, %v734, %v730
        %v736 = vmul.f32 %v720, %v735
        %738 = vrot.lane.b32.xlu0 %v736, 96
        %v739 = vpop.permute.xlu0 %738
        %vm741 = vcmask 1048320
        %742 = vst.msk [vmem:[%s394] sm:$0xff] %vm741, %v739
        %s743 = sand.u32 %s185, 1
        %s744 = scalar_lea.sflag [#allocation4], %s743
        %s745 = sand.u32 %s185, 1
        %s746 = smul.addr %s745, 8
        %s747 = scalar_lea.vmem [#allocation10], %s746
        // Predicated region
        $region53: #{tpu_custom_call.1} parent=35 // pred_check
          %p748 = pneg %p195
        $region54: #{tpu_custom_call.1} parent=35 // pred_check_branch
          %750 = sbr.rel (%p748) target = $region56
        $region55: #{tpu_custom_call.1} parent=35 // pred_region
          %752 = vsyncadd %s744, 0
          %s753 = sadd.s32 %s34, %s35
          %s754 = sadd.s32 %s753, %s33
          %s755 = smul.addr %s754, 8
          %s756 = scalar_lea.hbm %s4, %s755
          %s758 = sshll.u32 %s747, 4
          %s759 = int_to_ptr.vmem [resolvable:$true] %s758
          %s760 = sshll.u32 %s756, 4
          %s761 = int_to_ptr.hbm [resolvable:$true] %s760
          %763 = dma.vmem_to_hbm [thread:$0]  %s759, 128, %s761, %s744
        $region56: #{tpu_custom_call.1} parent=35 // pred_fallthru
          _
      $region36: #{tpu_custom_call.1} parent=5 // pred_fallthru
        _
      %p764 = scmp.le.s32.totalorder 2, %s22
      // Predicated region
      $region57: #{tpu_custom_call.1} parent=5 // pred_check
        %p765 = pneg %p764
      $region58: #{tpu_custom_call.1} parent=5 // pred_check_branch
        %767 = sbr.rel (%p765) target = $region60
      $region59: #{tpu_custom_call.1} parent=5 // pred_region
        %s768 = ssub.s32 %s22, 2
        // Predicated region
        $region61: #{tpu_custom_call.1} parent=59 // pred_check
          %p769 = pneg %p201
        $region62: #{tpu_custom_call.1} parent=59 // pred_check_branch
          %771 = sbr.rel (%p769) target = $region64
        $region63: #{tpu_custom_call.1} parent=59 // pred_region
          %s772 = sand.u32 %s186, 1
          %s773 = scalar_lea.sflag [#allocation4], %s772
          %s774 = sand.u32 %s186, 1
          %s775 = smul.addr %s774, 8
          %s776 = scalar_lea.vmem [#allocation10], %s775
          %778 = dma.done %s773, 128
        $region64: #{tpu_custom_call.1} parent=59 // pred_fallthru
          _
      $region60: #{tpu_custom_call.1} parent=5 // pred_fallthru
        _
    $region6: #{tpu_custom_call.1} parent=1 // loop_footer
      %s26 = sadd.s32 1, %s22
    $region7: #{tpu_custom_call.1} parent=1 // loop_footer_branch
      %21 = sbr.rel target = $region3
    $region8: #{tpu_custom_call.1} parent=1 // loop_exit
      _
    %779 = vsyncpa [#allocation3], 1
    %s780 = scalar_lea.sflag [#allocation3], 1
    %781 = vsyncpa %s780, 1
    %782 = vsyncpa [#allocation6], 1
    %s783 = scalar_lea.sflag [#allocation6], 1
    %784 = vsyncpa %s783, 1
    %785 = vsyncpa [#allocation9], 1
    %s786 = scalar_lea.sflag [#allocation9], 1
    %787 = vsyncpa %s786, 1
    %788 = vsyncpa [#allocation4], 1
    %s789 = scalar_lea.sflag [#allocation4], 1
    %790 = vsyncpa %s789, 1

</llo_original>
